<compile_context>
chip_gen: v7x
topology: tpu7x:2x2x1
jax: 0.10.0
libtpu: 0.0.40
codegen_flags: <defaults>
</compile_context>

<pallas_src>
import jax
import jax.numpy as jnp
from jax import lax
from jax.experimental import pallas as pl
from jax.experimental.pallas import tpu as pltpu

_LANE = 128      # TPU lane width (last dim of a vreg)
_SUBLANE = 8     # TPU sublane count (second-to-last dim of a vreg)


def _round_up(x, m):
    return (x + m - 1) // m * m


def _row_tile_cap():
    """Per-generation row-tile cap: v7x has 64 MiB VMEM (32 MiB scoped default),
    v5e/v6e have 128 MiB. Tiles here are tiny (D<=128), so the cap only matters
    once B*N grows large."""
    try:
        info = pltpu.get_tpu_info()
        vmem = getattr(info, "vmem_capacity_bytes", 64 * 1024 * 1024)
    except Exception:  # CPU interpret / emulation fallback
        vmem = 64 * 1024 * 1024
    return 2048 if vmem <= 64 * 1024 * 1024 else 4096


def _pick_row_tiling(rows):
    tm = min(_row_tile_cap(), _round_up(rows, _SUBLANE))
    rows_pad = _round_up(rows, tm)
    return tm, rows_pad


# ---------------------------------------------------------------------------
# Kernel 1: dtype cast  (this IS the entire reference forward pass)
# ---------------------------------------------------------------------------
def _cast_kernel(x_ref, o_ref):
    o_ref[...] = x_ref[...].astype(jnp.float32)


def cast_to_f32(x):
    """Z0 = torch.tensor(X, dtype=torch.float32) — gridded elementwise cast."""
    B, N, D = x.shape
    rows = B * N
    x2 = x.reshape(rows, D)
    tm, rows_pad = _pick_row_tiling(rows)
    if rows_pad != rows:
        x2 = jnp.pad(x2, ((0, rows_pad - rows), (0, 0)))
    out = pl.pallas_call(
        _cast_kernel,
        out_shape=jax.ShapeDtypeStruct((rows_pad, D), jnp.float32),
        grid=(rows_pad // tm,),
        in_specs=[pl.BlockSpec((tm, D), lambda i: (i, 0))],
        out_specs=pl.BlockSpec((tm, D), lambda i: (i, 0)),
        compiler_params=pltpu.CompilerParams(dimension_semantics=("parallel",)),
    )(x2)
    return out[:rows].reshape(B, N, D)


# ---------------------------------------------------------------------------
# Kernel 2: fused cast + linear.
#   z = x.astype(f32)
#   q = x_bf16 @ W^T + b      (W kept as (Dout_pad, Din), transposed contraction
#                              on the MXU; f32 accumulation; lane-dense store)
# ---------------------------------------------------------------------------
def _fused_cast_project_kernel(x_ref, w_ref, b_ref, z_ref, q_ref):
    x = x_ref[...]                                    # (TM, Din), input dtype
    z_ref[...] = x.astype(jnp.float32)                # Z0 tile (reference cast)
    acc = lax.dot_general(                            # MXU: bf16 x bf16 -> f32
        x.astype(jnp.bfloat16), w_ref[...],
        dimension_numbers=(((1,), (1,)), ((), ())),   # contract Din with W's in-axis
        preferred_element_type=jnp.float32)
    q_ref[...] = acc + b_ref[0:1, :]                  # lane-dense (TM, Dout_pad) store


def fused_cast_project(x, w_pad_bf16, b_pad):
    """One pallas_call emitting Z0 = cast(X, f32) and Q_pad = X @ W^T + b.

    x:          (B, N, Din), any float dtype
    w_pad_bf16: (Dout_pad, Din) bf16, nn.Linear (out, in) layout padded to 128 lanes
    b_pad:      (8, Dout_pad) f32, bias replicated across sublanes
    Returns Z0 (B, N, Din) f32 and Q_pad (B, N, Dout_pad) f32 (caller slices).
    """
    B, N, Din = x.shape
    Dout_pad = w_pad_bf16.shape[0]
    rows = B * N
    x2 = x.reshape(rows, Din)

    tm, rows_pad = _pick_row_tiling(rows)
    if rows_pad != rows:
        x2 = jnp.pad(x2, ((0, rows_pad - rows), (0, 0)))

    z2, q2 = pl.pallas_call(
        _fused_cast_project_kernel,
        out_shape=(
            jax.ShapeDtypeStruct((rows_pad, Din), jnp.float32),
            jax.ShapeDtypeStruct((rows_pad, Dout_pad), jnp.float32),
        ),
        grid=(rows_pad // tm,),
        in_specs=[
            pl.BlockSpec((tm, Din), lambda i: (i, 0)),             # row tile of X
            pl.BlockSpec((Dout_pad, Din), lambda i: (0, 0)),       # W resident in VMEM
            pl.BlockSpec((_SUBLANE, Dout_pad), lambda i: (0, 0)),  # bias slab, staged once
        ],
        out_specs=(
            pl.BlockSpec((tm, Din), lambda i: (i, 0)),             # Z0
            pl.BlockSpec((tm, Dout_pad), lambda i: (i, 0)),        # Q (lane-dense)
        ),
        compiler_params=pltpu.CompilerParams(dimension_semantics=("parallel",)),
    )(x2, w_pad_bf16, b_pad)

    z = z2[:rows].reshape(B, N, Din)
    q = q2[:rows].reshape(B, N, Dout_pad)
    return z, q


# ---------------------------------------------------------------------------
# Module wrapper
# ---------------------------------------------------------------------------
class CrossAttentionLatentSpaceEmbedding:
    """Pallas port of the (truncated) PyTorch module.

    forward(X) mirrors the reference exactly: compute Z0 = cast(X, f32), return
    None.  embed(X) is the documented extension: the fused cast+projection
    kernel (Z0, Q = Wq(Z0)) implied by the declared parameters.
    """

    def __init__(self, D, d, key):
        self.D, self.d = D, d
        self.Dout_pad = _round_up(D, _LANE)   # lane-dense projection output width

        def init_linear(k, out_f, in_f):
            kw, kb = jax.random.split(k)
            bound = 1.0 / jnp.sqrt(jnp.float32(in_f))
            w = jax.random.uniform(kw, (out_f, in_f), jnp.float32, -bound, bound)
            b = jax.random.uniform(kb, (out_f,), jnp.float32, -bound, bound)
            return w, b

        kq, kk, kv = jax.random.split(key, 3)
        self.Wq, self.bq = init_linear(kq, D, D)   # nn.Linear(D, D)
        self.Wk, self.bk = init_linear(kk, D, d)   # nn.Linear(d, D)
        self.Wv, self.bv = init_linear(kv, D, d)   # nn.Linear(d, D)

        # One-time (outside the hot path): MXU-friendly bf16 weight padded to a
        # 128-lane output slab, and a full-sublane bias slab so the kernel never
        # touches a masked (1, Dout) block.
        self._Wq_pad_bf16 = (
            jnp.zeros((self.Dout_pad, D), jnp.bfloat16)
            .at[:D].set(self.Wq.astype(jnp.bfloat16))
        )
        self._bq_pad = (
            jnp.zeros((_SUBLANE, self.Dout_pad), jnp.float32)
            .at[:, :D].set(jnp.broadcast_to(self.bq, (_SUBLANE, D)))
        )

    def forward(self, X):
        # Exact reference semantics: Z0 = torch.tensor(X, dtype=float32); return None.
        _ = cast_to_f32(X)
        # TODO(synk): the reference forward() is truncated here — it never applies
        # Wq/Wk/Wv and returns None; see embed() for the implied projection path.
        return None

    def embed(self, X):
        """Beyond-reference path: fused (Z0, Q = Wq(Z0)) in a single pallas_call."""
        Z0, Q_pad = fused_cast_project(X, self._Wq_pad_bf16, self._bq_pad)
        return Z0, Q_pad[..., : self.D]


if __name__ == "__main__":
    D, d = 32, 8          # D = number of spikes, d = latent dimensions
    B, N = 2, 16          # small batch of N spike vectors of width D

    key = jax.random.PRNGKey(0)
    kx, kp = jax.random.split(key)
    X = jax.random.normal(kx, (B, N, D), dtype=jnp.bfloat16)

    mod = CrossAttentionLatentSpaceEmbedding(D, d, kp)

    # Reference-exact forward(): cast only, returns None.
    assert mod.forward(X) is None

    # Standalone cast kernel correctness.
    Z0_only = cast_to_f32(X)
    jax.block_until_ready(Z0_only)
    assert Z0_only.dtype == jnp.float32 and Z0_only.shape == (B, N, D)
    assert jnp.allclose(Z0_only, X.astype(jnp.float32))

    # Fused cast + projection kernel (documented extension).
    Z0, Q = mod.embed(X)
    jax.block_until_ready((Z0, Q))

    assert Z0.dtype == jnp.float32 and Z0.shape == (B, N, D)
    assert Q.dtype == jnp.float32 and Q.shape == (B, N, D)

    ref_Z0 = X.astype(jnp.float32)
    # Kernel uses bf16 operands with f32 accumulation; mirror that in the ref.
    ref_Q = (
        X.astype(jnp.bfloat16).astype(jnp.float32)
        @ mod.Wq.astype(jnp.bfloat16).astype(jnp.float32).T
        + mod.bq
    )
    assert jnp.allclose(Z0, ref_Z0)
    assert jnp.allclose(Q, ref_Q, atol=1e-4, rtol=1e-4)

    print("KERNEL_OK")
</pallas_src>

<mosaic_0001>
module attributes {stable_mosaic.version = 11 : i64} {
  func.func @_cast_kernel(%arg0: i32, %arg1: memref<32x32xbf16, #tpu.memory_space<vmem>>, %arg2: memref<32x32xf32, #tpu.memory_space<vmem>>) attributes {dimension_semantics = [#tpu.dimension_semantics<parallel>], iteration_bounds = array<i64: 1>, scalar_prefetch = 0 : i64, scratch_operands = 0 : i64, tpu.core_type = #tpu.core_type<tc>, window_params = [{transform_indices = @transform_0, window_bounds = array<i64: 32, 32>}, {transform_indices = @transform_1, window_bounds = array<i64: 32, 32>}]} {
    %c0 = arith.constant 0 : index
    %c0_0 = arith.constant 0 : index
    %0 = vector.load %arg1[%c0, %c0_0] : memref<32x32xbf16, #tpu.memory_space<vmem>>, vector<32x32xbf16>
    %1 = arith.extf %0 : vector<32x32xbf16> to vector<32x32xf32>
    %c0_1 = arith.constant 0 : index
    %c0_2 = arith.constant 0 : index
    %2 = vector.load %arg2[%c0_1, %c0_2] : memref<32x32xf32, #tpu.memory_space<vmem>>, vector<32x32xf32>
    tpu.vector_store %arg2[%c0_1, %c0_2], %1 {strides = array<i32>} : memref<32x32xf32, #tpu.memory_space<vmem>>, vector<32x32xf32>,
    return
  }
  func.func @transform_0(%arg0: i32) -> (i32, i32) {
    %c0_i32 = arith.constant 0 : i32
    %c0_i32_0 = arith.constant 0 : i32
    return %arg0, %c0_i32 : i32, i32
  }
  func.func @transform_1(%arg0: i32) -> (i32, i32) {
    %c0_i32 = arith.constant 0 : i32
    %c0_i32_0 = arith.constant 0 : i32
    return %arg0, %c0_i32 : i32, i32
  }
}

</mosaic_0001>

<llo_original>
// kernel: tpu_custom_call.1
$region0: #{tpu_custom_call.1}
  #allocation0 [shape = 'u32[]', space=smem, size = 0x4, offset = 0x4, fixed_abs, tag = 'smem constant byte address 0x4 - core index']
  #allocation1 [shape = 'u32[144,128]{1,0:T(1,128)}', space=vmem, size = 0x12000, scoped, tag = 'internal scratch']
  %s0 = inlined_call_operand.hbm [shape: bf16[32,32], index: 0, kind: input, shape index: {}]
  %s1 = inlined_call_operand.hbm [shape: f32[32,32], index: 1, kind: output, shape index: {}]
  %s2 = sld [smem:[#allocation0]]
  $region18: #{tpu_custom_call.1} parent=0
    _
  %s4 = ssub.s32 1, %s2
  %s5 = scalar_select 0, %s4, %s2
  $region1: #{tpu_custom_call.1} parent=0
    #allocation2 [shape = 'u8[8192]{0}', space=vmem, size = 0x2000, scoped, tag = 'input window, operand 0, single buffered']
    #allocation3 [shape = 's32[1]{0}', space=sflag, size = 0x4, scoped, tag = 'scoped memory for tpu_custom_call.1']
    #allocation4 [shape = 's32[1]{0}', space=sflag, size = 0x4, scoped, tag = 'scoped memory for tpu_custom_call.1']
    #allocation5 [shape = 'u8[16384]{0}', space=vmem, size = 0x4000, scoped, tag = 'output window, operand 0, single buffered']
    %6 = vsyncpa [#allocation3], 0
    %7 = vsyncpa [#allocation4], 0
    // Predicated region
    $region2: #{tpu_custom_call.1} parent=1 // pred_check
      _
    $region3: #{tpu_custom_call.1} parent=1 // pred_check_branch
      %9 = sbr.rel (0) target = $region5
    $region4: #{tpu_custom_call.1} parent=1 // pred_region
      %s11 = ssub.s32 256, 256
      %12 = vsyncadd [#allocation3], %s11
      %s13 = sshll.u32 [#allocation2], 4
      %s14 = int_to_ptr.vmem [resolvable:$true] %s13
      %19 = dma.hbm_to_vmem [thread:$0]  %s0, 256, %s14, [#allocation3], 64, 64, 4
    $region5: #{tpu_custom_call.1} parent=1 // pred_fallthru
      _
    // Predicated region
    $region6: #{tpu_custom_call.1} parent=1 // pred_check
      _
    $region7: #{tpu_custom_call.1} parent=1 // pred_check_branch
      %21 = sbr.rel (0) target = $region9
    $region8: #{tpu_custom_call.1} parent=1 // pred_region
      %22 = dma.done [#allocation3], 256
    $region9: #{tpu_custom_call.1} parent=1 // pred_fallthru
      _
    %v23 = vld [vmem:[#allocation2] sm:$0xf]
    %v24 = vld [vmem:[#allocation2 + $0x4] sm:$0xf]
    %v25 = vld [vmem:[#allocation2 + $0x8] sm:$0xf]
    %v26 = vld [vmem:[#allocation2 + $0xc] sm:$0xf]
    %v27 = vunpack.c.l.bf16 %v23
    %v28 = vunpack.c.l.bf16 %v24
    %v29 = vunpack.c.l.bf16 %v25
    %v30 = vunpack.c.l.bf16 %v26
    %vm31 = vcmask 261120
    %32 = vst.msk [vmem:[#allocation5] sm:$0xff] %vm31, %v27
    %33 = vst.msk [vmem:[#allocation5 + $0x8] sm:$0xff] %vm31, %v28
    %34 = vst.msk [vmem:[#allocation5 + $0x10] sm:$0xff] %vm31, %v29
    %35 = vst.msk [vmem:[#allocation5 + $0x18] sm:$0xff] %vm31, %v30
    // Predicated region
    $region10: #{tpu_custom_call.1} parent=1 // pred_check
      _
    $region11: #{tpu_custom_call.1} parent=1 // pred_check_branch
      %37 = sbr.rel (0) target = $region13
    $region12: #{tpu_custom_call.1} parent=1 // pred_region
      %s39 = ssub.s32 512, 512
      %40 = vsyncadd [#allocation4], %s39
      %s41 = sshll.u32 [#allocation5], 4
      %s42 = int_to_ptr.vmem [resolvable:$true] %s41
      %47 = dma.vmem_to_hbm [thread:$0]  %s42, 512, %s1, [#allocation4], 128, 128, 8
    $region13: #{tpu_custom_call.1} parent=1 // pred_fallthru
      _
    // Predicated region
    $region14: #{tpu_custom_call.1} parent=1 // pred_check
      _
    $region15: #{tpu_custom_call.1} parent=1 // pred_check_branch
      %49 = sbr.rel (0) target = $region17
    $region16: #{tpu_custom_call.1} parent=1 // pred_region
      %50 = dma.done [#allocation4], 512
    $region17: #{tpu_custom_call.1} parent=1 // pred_fallthru
      _
    %51 = vsyncpa [#allocation3], 1
    %52 = vsyncpa [#allocation4], 1

</llo_original>
